<compile_context>
chip_gen: v5e
topology: v5e:2x2
jax: 0.10.0
libtpu: 0.0.40
codegen_flags: <defaults>
</compile_context>

<pallas_src>
import jax
import jax.numpy as jnp
from jax.experimental import pallas as pl
from jax.experimental.pallas import tpu as pltpu


def _koopman_kernel(xt_ref, w12t_ref, b2t_ref, w3t_ref, b3t_ref, out_ref):
    xT = xt_ref[...]                                               # (D, TM) lane-dense
    hT = jnp.dot(w12t_ref[...], xT,
                 preferred_element_type=jnp.float32,
                 precision=jax.lax.Precision.HIGHEST)              # (H2, TM)
    hT = jnp.tanh(hT + b2t_ref[...])                               # (H2, 1) lane-broadcast
    psiT = jnp.dot(w3t_ref[...], hT,
                   preferred_element_type=jnp.float32,
                   precision=jax.lax.Precision.HIGHEST)            # (P, TM)
    psiT = psiT + b3t_ref[...]                                     # (P, 1) lane-broadcast
    ones = jnp.ones((1, xT.shape[1]), dtype=jnp.float32)
    # Concatenate along the SUBLANE axis (cheap shifts) and do a single dense,
    # aligned full-tile store -- no masked partial-lane stores.
    out_ref[...] = jnp.concatenate([ones, xT, psiT], axis=0).astype(out_ref.dtype)


def koopman_forward(x, params, *, block_b=16384, features_major=False):
    """x: (B, input_size) or (input_size,) float32.

    Returns (B, 1 + D + P) matching the PyTorch module (or the 1-D squeezed form).
    With features_major=True, returns the kernel-native (1 + D + P, B) layout and
    skips the wrapper-side transpose.
    """
    w1, w2, b2, w3, b3 = params

    squeeze_back = x.ndim == 1
    if squeeze_back:
        x = x[None, :]
    x = x.astype(jnp.float32)

    B, D = x.shape
    H2 = w2.shape[1]
    P = w3.shape[1]
    out_dim = 1 + D + P

    # Fuse the first two Linears (no nonlinearity in between): one fewer MXU pass.
    # Pre-transpose every parameter to features-major once (tiny arrays).
    w12_t = jnp.dot(w2.T, w1.T, precision=jax.lax.Precision.HIGHEST)    # (H2, D) = (W1@W2)^T
    b2_t = jnp.reshape(b2, (H2, 1)).astype(jnp.float32)
    w3_t = jnp.transpose(w3).astype(jnp.float32)                        # (P, H2)
    b3_t = jnp.reshape(b3, (P, 1)).astype(jnp.float32)

    # Lane-dense input: batch on the lane axis.
    xt = x.T                                                            # (D, B)

    if B <= block_b:
        tm = B                              # full-extent tile: legal for any B
    else:
        tm = max(128, (block_b // 128) * 128)  # multiple of 128 -> legal lane tiling
    grid = (pl.cdiv(B, tm),)                # ragged last tile handled by Pallas masking

    out_fm = pl.pallas_call(
        _koopman_kernel,
        out_shape=jax.ShapeDtypeStruct((out_dim, B), jnp.float32),
        grid=grid,
        in_specs=[
            pl.BlockSpec((D, tm), lambda i: (0, i)),      # xT tile (lane-dense)
            pl.BlockSpec((H2, D), lambda i: (0, 0)),      # W12^T (resident)
            pl.BlockSpec((H2, 1), lambda i: (0, 0)),      # b2^T  (resident)
            pl.BlockSpec((P, H2), lambda i: (0, 0)),      # W3^T  (resident)
            pl.BlockSpec((P, 1), lambda i: (0, 0)),       # b3^T  (resident)
        ],
        out_specs=pl.BlockSpec((out_dim, tm), lambda i: (0, i)),
        compiler_params=pltpu.CompilerParams(
            dimension_semantics=("parallel",),            # megacore/2-TC sharding where available
            vmem_limit_bytes=32 * 1024 * 1024,            # explicit; ~17 MiB working set at tm=16384
        ),
    )(xt, w12_t, b2_t, w3_t, b3_t)

    if features_major:
        out = out_fm
        if squeeze_back:
            out = out[:, 0]
        return out

    out = out_fm.T                                        # match PyTorch (B, out_dim) layout
    if squeeze_back:
        out = out[0]
    return out


def init_params(key, input_size, layer_sizes=(64, 64), n_psi_train=22):
    """Deterministic synthetic parameters (stored as (in, out), i.e. W^T of nn.Linear)."""
    k1, k2, k3, k4, k5 = jax.random.split(key, 5)
    h1, h2 = layer_sizes
    w1 = jax.random.normal(k1, (input_size, h1), jnp.float32) * 0.2   # Linear, bias=False
    w2 = jax.random.normal(k2, (h1, h2), jnp.float32) * 0.2           # Linear, bias=True
    b2 = jax.random.normal(k3, (1, h2), jnp.float32) * 0.1
    w3 = jax.random.normal(k4, (h2, n_psi_train), jnp.float32) * 0.2  # Linear, bias=True
    b3 = jax.random.normal(k5, (1, n_psi_train), jnp.float32) * 0.1
    return (w1, w2, b2, w3, b3)


def _reference_forward(x, params):
    """Pure-jnp reference matching the PyTorch forward exactly (unfused matmuls)."""
    w1, w2, b2, w3, b3 = params
    squeeze_back = x.ndim == 1
    if squeeze_back:
        x = x[None, :]
    h = x @ w1
    h = h @ w2 + b2
    h = jnp.tanh(h)
    psi = h @ w3 + b3
    out = jnp.concatenate([jnp.ones_like(x[:, :1]), x, psi], axis=1)
    if squeeze_back:
        out = out[0]
    return out


if __name__ == "__main__":
    key = jax.random.PRNGKey(0)
    kx1, kx2, kp = jax.random.split(key, 3)

    input_size = 4
    params = init_params(kp, input_size, layer_sizes=(64, 64), n_psi_train=22)

    # 1) Small batch: single full-extent tile.
    x_small = jax.random.normal(kx1, (8, input_size), jnp.float32)
    out_small = jax.block_until_ready(koopman_forward(x_small, params))
    ref_small = _reference_forward(x_small, params)
    assert out_small.shape == (8, 1 + input_size + 22), out_small.shape
    assert jnp.allclose(out_small, ref_small, atol=1e-4, rtol=1e-4), "mismatch (small)"

    # 2) Larger batch, block_b=256 -> grid of 4 tiles with a ragged (232-row) last
    #    tile: exercises the pad-free edge masking path.
    x_big = jax.random.normal(kx2, (1000, input_size), jnp.float32)
    out_big = jax.block_until_ready(koopman_forward(x_big, params, block_b=256))
    ref_big = _reference_forward(x_big, params)
    assert out_big.shape == (1000, 1 + input_size + 22), out_big.shape
    assert jnp.allclose(out_big, ref_big, atol=1e-4, rtol=1e-4), "mismatch (tiled)"

    # 2b) Same batch with the default (single-tile) block size.
    out_big_d = jax.block_until_ready(koopman_forward(x_big, params))
    assert jnp.allclose(out_big_d, ref_big, atol=1e-4, rtol=1e-4), "mismatch (default tile)"

    # 2c) Kernel-native features-major output (no wrapper transpose).
    out_fm = jax.block_until_ready(koopman_forward(x_big, params, block_b=256,
                                                   features_major=True))
    assert out_fm.shape == (1 + input_size + 22, 1000), out_fm.shape
    assert jnp.allclose(out_fm, ref_big.T, atol=1e-4, rtol=1e-4), "mismatch (features-major)"

    # 3) 1-D input path (squeeze_back, like the PyTorch module).
    x_1d = x_small[0]
    out_1d = jax.block_until_ready(koopman_forward(x_1d, params))
    ref_1d = _reference_forward(x_1d, params)
    assert out_1d.shape == (1 + input_size + 22,), out_1d.shape
    assert jnp.allclose(out_1d, ref_1d, atol=1e-4, rtol=1e-4), "mismatch (1-D)"

    print("KERNEL_OK")
</pallas_src>

<mosaic_0001>
module attributes {stable_mosaic.version = 11 : i64} {
  func.func @_koopman_kernel(%arg0: i32, %arg1: memref<4x8xf32, #tpu.memory_space<vmem>>, %arg2: memref<64x4xf32, #tpu.memory_space<vmem>>, %arg3: memref<64x1xf32, #tpu.memory_space<vmem>>, %arg4: memref<22x64xf32, #tpu.memory_space<vmem>>, %arg5: memref<22x1xf32, #tpu.memory_space<vmem>>, %arg6: memref<27x8xf32, #tpu.memory_space<vmem>>) attributes {dimension_semantics = [#tpu.dimension_semantics<parallel>], iteration_bounds = array<i64: 1>, scalar_prefetch = 0 : i64, scratch_operands = 0 : i64, tpu.core_type = #tpu.core_type<tc>, window_params = [{transform_indices = @transform_0, window_bounds = array<i64: 4, 8>}, {pipeline_mode = #tpu.pipeline_mode<synchronous>, transform_indices = @transform_1, window_bounds = array<i64: 64, 4>}, {pipeline_mode = #tpu.pipeline_mode<synchronous>, transform_indices = @transform_2, window_bounds = array<i64: 64, 1>}, {pipeline_mode = #tpu.pipeline_mode<synchronous>, transform_indices = @transform_3, window_bounds = array<i64: 22, 64>}, {pipeline_mode = #tpu.pipeline_mode<synchronous>, transform_indices = @transform_4, window_bounds = array<i64: 22, 1>}, {transform_indices = @transform_5, window_bounds = array<i64: 27, 8>}]} {
    %c0 = arith.constant 0 : index
    %c0_0 = arith.constant 0 : index
    %0 = vector.load %arg1[%c0, %c0_0] : memref<4x8xf32, #tpu.memory_space<vmem>>, vector<4x8xf32>
    %c0_1 = arith.constant 0 : index
    %c0_2 = arith.constant 0 : index
    %1 = vector.load %arg2[%c0_1, %c0_2] : memref<64x4xf32, #tpu.memory_space<vmem>>, vector<64x4xf32>
    %cst = arith.constant dense<0.000000e+00> : vector<64x8xf32>
    %2 = tpu.matmul %1, %0, %cst {dimension_numbers = #tpu.dot_dimension_numbers<[1], [0], [0], [1], [0, 0, 1, 1], [], []>, precision = #tpu.contract_precision<fp32>} : vector<64x4xf32>, vector<4x8xf32>, vector<64x8xf32> -> vector<64x8xf32>
    %c0_3 = arith.constant 0 : index
    %c0_4 = arith.constant 0 : index
    %3 = vector.load %arg3[%c0_3, %c0_4] : memref<64x1xf32, #tpu.memory_space<vmem>>, vector<64x1xf32>
    %4 = vector.broadcast %3 : vector<64x1xf32> to vector<64x8xf32>
    %5 = arith.addf %2, %4 : vector<64x8xf32>
    %6 = math.tanh %5 : vector<64x8xf32>
    %c0_5 = arith.constant 0 : index
    %c0_6 = arith.constant 0 : index
    %7 = vector.load %arg4[%c0_5, %c0_6] : memref<22x64xf32, #tpu.memory_space<vmem>>, vector<22x64xf32>
    %cst_7 = arith.constant dense<0.000000e+00> : vector<22x8xf32>
    %8 = tpu.matmul %7, %6, %cst_7 {dimension_numbers = #tpu.dot_dimension_numbers<[1], [0], [0], [1], [0, 0, 1, 1], [], []>, precision = #tpu.contract_precision<fp32>} : vector<22x64xf32>, vector<64x8xf32>, vector<22x8xf32> -> vector<22x8xf32>
    %c0_8 = arith.constant 0 : index
    %c0_9 = arith.constant 0 : index
    %9 = vector.load %arg5[%c0_8, %c0_9] : memref<22x1xf32, #tpu.memory_space<vmem>>, vector<22x1xf32>
    %10 = vector.broadcast %9 : vector<22x1xf32> to vector<22x8xf32>
    %11 = arith.addf %8, %10 : vector<22x8xf32>
    %cst_10 = arith.constant 1.000000e+00 : f32
    %12 = vector.broadcast %cst_10 : f32 to vector<1x8xf32>
    %13 = tpu.concatenate %12, %0, %11 in 0 : vector<1x8xf32>, vector<4x8xf32>, vector<22x8xf32> -> vector<27x8xf32>
    %c0_11 = arith.constant 0 : index
    %c0_12 = arith.constant 0 : index
    %14 = vector.load %arg6[%c0_11, %c0_12] : memref<27x8xf32, #tpu.memory_space<vmem>>, vector<27x8xf32>
    tpu.vector_store %arg6[%c0_11, %c0_12], %13 {strides = array<i32>} : memref<27x8xf32, #tpu.memory_space<vmem>>, vector<27x8xf32>,
    return
  }
  func.func @transform_0(%arg0: i32) -> (i32, i32) {
    %c0_i32 = arith.constant 0 : i32
    %c0_i32_0 = arith.constant 0 : i32
    return %c0_i32, %arg0 : i32, i32
  }
  func.func @transform_1(%arg0: i32) -> (i32, i32) {
    %c0_i32 = arith.constant 0 : i32
    %c0_i32_0 = arith.constant 0 : i32
    %c0_i32_1 = arith.constant 0 : i32
    return %c0_i32, %c0_i32_0 : i32, i32
  }
  func.func @transform_2(%arg0: i32) -> (i32, i32) {
    %c0_i32 = arith.constant 0 : i32
    %c0_i32_0 = arith.constant 0 : i32
    %c0_i32_1 = arith.constant 0 : i32
    return %c0_i32, %c0_i32_0 : i32, i32
  }
  func.func @transform_3(%arg0: i32) -> (i32, i32) {
    %c0_i32 = arith.constant 0 : i32
    %c0_i32_0 = arith.constant 0 : i32
    %c0_i32_1 = arith.constant 0 : i32
    return %c0_i32, %c0_i32_0 : i32, i32
  }
  func.func @transform_4(%arg0: i32) -> (i32, i32) {
    %c0_i32 = arith.constant 0 : i32
    %c0_i32_0 = arith.constant 0 : i32
    %c0_i32_1 = arith.constant 0 : i32
    return %c0_i32, %c0_i32_0 : i32, i32
  }
  func.func @transform_5(%arg0: i32) -> (i32, i32) {
    %c0_i32 = arith.constant 0 : i32
    %c0_i32_0 = arith.constant 0 : i32
    return %c0_i32, %arg0 : i32, i32
  }
}

</mosaic_0001>

<llo_original>
// kernel: tpu_custom_call.1
$region0: #{tpu_custom_call.1}
  #allocation0 [shape = 'u32[]', space=smem, size = 0x4, offset = 0x4, fixed_abs, tag = 'smem constant byte address 0x4 - core index']
  #allocation1 [shape = 'u32[72,128]{1,0:T(1,128)}', space=vmem, size = 0x9000, scoped, tag = 'internal scratch']
  %s0 = inlined_call_operand.vmem [shape: f32[4,8], index: 0, kind: input, shape index: {}]
  %s1 = inlined_call_operand.vmem [shape: f32[64,4], index: 1, kind: input, shape index: {}]
  %s2 = inlined_call_operand.vmem [shape: f32[64,1], index: 2, kind: input, shape index: {}]
  %s3 = inlined_call_operand.vmem [shape: f32[22,64], index: 3, kind: input, shape index: {}]
  %s4 = inlined_call_operand.vmem [shape: f32[22,1], index: 4, kind: input, shape index: {}]
  %s5 = inlined_call_operand.vmem [shape: f32[27,8], index: 5, kind: output, shape index: {}]
  %s6 = sld [smem:[#allocation0]]
  $region30: #{tpu_custom_call.1} parent=0
    _
  %s8 = ssub.s32 1, %s6
  %s9 = scalar_select 0, %s8, %s6
  // Predicated region
  $region2: #{tpu_custom_call.1} parent=0 // pred_check
    _
  $region3: #{tpu_custom_call.1} parent=0 // pred_check_branch
    %11 = sbr.rel (0) target = $region5
  $region4: #{tpu_custom_call.1} parent=0 // pred_region
    _
  $region5: #{tpu_custom_call.1} parent=0 // pred_fallthru
    _
  // Predicated region
  $region6: #{tpu_custom_call.1} parent=0 // pred_check
    _
  $region7: #{tpu_custom_call.1} parent=0 // pred_check_branch
    %13 = sbr.rel (0) target = $region9
  $region8: #{tpu_custom_call.1} parent=0 // pred_region
    _
  $region9: #{tpu_custom_call.1} parent=0 // pred_fallthru
    _
  // Predicated region
  $region10: #{tpu_custom_call.1} parent=0 // pred_check
    _
  $region11: #{tpu_custom_call.1} parent=0 // pred_check_branch
    %15 = sbr.rel (0) target = $region13
  $region12: #{tpu_custom_call.1} parent=0 // pred_region
    _
  $region13: #{tpu_custom_call.1} parent=0 // pred_fallthru
    _
  // Predicated region
  $region14: #{tpu_custom_call.1} parent=0 // pred_check
    _
  $region15: #{tpu_custom_call.1} parent=0 // pred_check_branch
    %17 = sbr.rel (0) target = $region17
  $region16: #{tpu_custom_call.1} parent=0 // pred_region
    _
  $region17: #{tpu_custom_call.1} parent=0 // pred_fallthru
    _
  // Predicated region
  $region18: #{tpu_custom_call.1} parent=0 // pred_check
    _
  $region19: #{tpu_custom_call.1} parent=0 // pred_check_branch
    %19 = sbr.rel (0) target = $region21
  $region20: #{tpu_custom_call.1} parent=0 // pred_region
    _
  $region21: #{tpu_custom_call.1} parent=0 // pred_fallthru
    _
  %v20 = vld [vmem:[%s0] sm:$0xf]
  %v21 = vld [vmem:[%s1] sm:$0xff]
  %v22 = vld [vmem:[%s1 + $0x8] sm:$0xff]
  %v23 = vld [vmem:[%s1 + $0x10] sm:$0xff]
  %v24 = vld [vmem:[%s1 + $0x18] sm:$0xff]
  %v25 = vld [vmem:[%s1 + $0x20] sm:$0xff]
  %v26 = vld [vmem:[%s1 + $0x28] sm:$0xff]
  %v27 = vld [vmem:[%s1 + $0x30] sm:$0xff]
  %v28 = vld [vmem:[%s1 + $0x38] sm:$0xff]
  %v29 = vld [vmem:[%s2] sm:$0xff]
  %v30 = vld [vmem:[%s2 + $0x8] sm:$0xff]
  %v31 = vld [vmem:[%s2 + $0x10] sm:$0xff]
  %v32 = vld [vmem:[%s2 + $0x18] sm:$0xff]
  %v33 = vld [vmem:[%s2 + $0x20] sm:$0xff]
  %v34 = vld [vmem:[%s2 + $0x28] sm:$0xff]
  %v35 = vld [vmem:[%s2 + $0x30] sm:$0xff]
  %v36 = vld [vmem:[%s2 + $0x38] sm:$0xff]
  %38 = vset.pattern.permute.xlu0 0
  %39 = vperm.xlu0 %38, %v29
  %v40 = vpop.permute.xlu0 %39
  %43 = vset.pattern.permute.xlu0 0
  %44 = vperm.xlu0 %43, %v30
  %v45 = vpop.permute.xlu0 %44
  %48 = vset.pattern.permute.xlu0 0
  %49 = vperm.xlu0 %48, %v31
  %v50 = vpop.permute.xlu0 %49
  %53 = vset.pattern.permute.xlu0 0
  %54 = vperm.xlu0 %53, %v32
  %v55 = vpop.permute.xlu0 %54
  %58 = vset.pattern.permute.xlu0 0
  %59 = vperm.xlu0 %58, %v33
  %v60 = vpop.permute.xlu0 %59
  %63 = vset.pattern.permute.xlu0 0
  %64 = vperm.xlu0 %63, %v34
  %v65 = vpop.permute.xlu0 %64
  %68 = vset.pattern.permute.xlu0 0
  %69 = vperm.xlu0 %68, %v35
  %v70 = vpop.permute.xlu0 %69
  %73 = vset.pattern.permute.xlu0 0
  %74 = vperm.xlu0 %73, %v36
  %v75 = vpop.permute.xlu0 %74
  %vm77 = vcmask 31744
  %v79 = vsel %vm77, %v21, 0
  %v82 = vsel %vm77, %v22, 0
  %v85 = vsel %vm77, %v23, 0
  %v88 = vsel %vm77, %v24, 0
  %v91 = vsel %vm77, %v25, 0
  %v94 = vsel %vm77, %v26, 0
  %v97 = vsel %vm77, %v27, 0
  %v100 = vsel %vm77, %v28, 0
  %vm102 = vcmask 1043456
  %v104 = vsel %vm102, %v20, 0
  %106 = vmatpush.msra.mxu0 0.0
  %107 = vmatpush.msra.mxu0 0.0
  %108 = vmatpush.msra.mxu0 0.0
  %109 = vmatpush.msra.mxu0 0.0
  %110 = vmatpush.msra.mxu0 0.0
  %111 = vmatpush.msra.mxu0 0.0
  %112 = vmatpush.msra.mxu0 0.0
  %113 = vmatpush.msra.mxu0 0.0
  %114 = vmatpush.msra.mxu0 0.0
  %115 = vmatpush.msra.mxu0 0.0
  %116 = vmatpush.msra.mxu0 0.0
  %117 = vmatpush.msra.mxu0 0.0
  %118 = vmatpush.msra.mxu0 0.0
  %119 = vmatpush.msra.mxu0 0.0
  %120 = vmatpush.msra.mxu0 0.0
  %v121 = vand.u32 %v104, 4294901760
  %122 = vmatpush.msra.mxu0 %v121
  %v123 = vand.u32 %v79, 4294901760
  %v124 = vsub.f32 %v79, %v123
  %v125 = vand.u32 %v124, 4294901760
  %v126 = vsub.f32 %v124, %v125
  %v127 = vand.u32 %v126, 4294901760
  %128 = vmatmul.f32.gmra.mxu0 %v127
  %v129 = vpop.f32.mrf.mxu0
  %v130 = vadd.f32 %v40, %v129
  %v131 = vand.u32 %v82, 4294901760
  %v132 = vsub.f32 %v82, %v131
  %v133 = vand.u32 %v132, 4294901760
  %v134 = vsub.f32 %v132, %v133
  %v135 = vand.u32 %v134, 4294901760
  %136 = vmatmul.f32.gmra.mxu0 %v135
  %v137 = vpop.f32.mrf.mxu0
  %v138 = vadd.f32 %v45, %v137
  %v139 = vand.u32 %v85, 4294901760
  %v140 = vsub.f32 %v85, %v139
  %v141 = vand.u32 %v140, 4294901760
  %v142 = vsub.f32 %v140, %v141
  %v143 = vand.u32 %v142, 4294901760
  %144 = vmatmul.f32.gmra.mxu0 %v143
  %v145 = vpop.f32.mrf.mxu0
  %v146 = vadd.f32 %v50, %v145
  %v147 = vand.u32 %v88, 4294901760
  %v148 = vsub.f32 %v88, %v147
  %v149 = vand.u32 %v148, 4294901760
  %v150 = vsub.f32 %v148, %v149
  %v151 = vand.u32 %v150, 4294901760
  %152 = vmatmul.f32.gmra.mxu0 %v151
  %v153 = vpop.f32.mrf.mxu0
  %v154 = vadd.f32 %v55, %v153
  %v155 = vand.u32 %v91, 4294901760
  %v156 = vsub.f32 %v91, %v155
  %v157 = vand.u32 %v156, 4294901760
  %v158 = vsub.f32 %v156, %v157
  %v159 = vand.u32 %v158, 4294901760
  %160 = vmatmul.f32.gmra.mxu0 %v159
  %v161 = vpop.f32.mrf.mxu0
  %v162 = vadd.f32 %v60, %v161
  %v163 = vand.u32 %v94, 4294901760
  %v164 = vsub.f32 %v94, %v163
  %v165 = vand.u32 %v164, 4294901760
  %v166 = vsub.f32 %v164, %v165
  %v167 = vand.u32 %v166, 4294901760
  %168 = vmatmul.f32.gmra.mxu0 %v167
  %v169 = vpop.f32.mrf.mxu0
  %v170 = vadd.f32 %v65, %v169
  %v171 = vand.u32 %v97, 4294901760
  %v172 = vsub.f32 %v97, %v171
  %v173 = vand.u32 %v172, 4294901760
  %v174 = vsub.f32 %v172, %v173
  %v175 = vand.u32 %v174, 4294901760
  %176 = vmatmul.f32.gmra.mxu0 %v175
  %v177 = vpop.f32.mrf.mxu0
  %v178 = vadd.f32 %v70, %v177
  %v179 = vand.u32 %v100, 4294901760
  %v180 = vsub.f32 %v100, %v179
  %v181 = vand.u32 %v180, 4294901760
  %v182 = vsub.f32 %v180, %v181
  %v183 = vand.u32 %v182, 4294901760
  %184 = vmatmul.f32.gmra.mxu0 %v183
  %v185 = vpop.f32.mrf.mxu0
  %v186 = vadd.f32 %v75, %v185
  %187 = vdwg.mxu0
  %188 = vmatpush.msra.mxu0 0.0
  %189 = vmatpush.msra.mxu0 0.0
  %190 = vmatpush.msra.mxu0 0.0
  %191 = vmatpush.msra.mxu0 0.0
  %192 = vmatpush.msra.mxu0 0.0
  %193 = vmatpush.msra.mxu0 0.0
  %194 = vmatpush.msra.mxu0 0.0
  %195 = vmatpush.msra.mxu0 0.0
  %196 = vmatpush.msra.mxu0 0.0
  %197 = vmatpush.msra.mxu0 0.0
  %198 = vmatpush.msra.mxu0 0.0
  %199 = vmatpush.msra.mxu0 0.0
  %200 = vmatpush.msra.mxu0 0.0
  %201 = vmatpush.msra.mxu0 0.0
  %202 = vmatpush.msra.mxu0 0.0
  %v203 = vand.u32 %v104, 4294901760
  %v204 = vsub.f32 %v104, %v203
  %v205 = vand.u32 %v204, 4294901760
  %v206 = vsub.f32 %v204, %v205
  %v207 = vand.u32 %v206, 4294901760
  %208 = vmatpush.msra.mxu0 %v207
  %v209 = vand.u32 %v79, 4294901760
  %210 = vmatmul.f32.gmra.mxu0 %v209
  %v211 = vpop.f32.mrf.mxu0
  %v212 = vadd.f32 %v130, %v211
  %v213 = vand.u32 %v82, 4294901760
  %214 = vmatmul.f32.gmra.mxu0 %v213
  %v215 = vpop.f32.mrf.mxu0
  %v216 = vadd.f32 %v138, %v215
  %v217 = vand.u32 %v85, 4294901760
  %218 = vmatmul.f32.gmra.mxu0 %v217
  %v219 = vpop.f32.mrf.mxu0
  %v220 = vadd.f32 %v146, %v219
  %v221 = vand.u32 %v88, 4294901760
  %222 = vmatmul.f32.gmra.mxu0 %v221
  %v223 = vpop.f32.mrf.mxu0
  %v224 = vadd.f32 %v154, %v223
  %v225 = vand.u32 %v91, 4294901760
  %226 = vmatmul.f32.gmra.mxu0 %v225
  %v227 = vpop.f32.mrf.mxu0
  %v228 = vadd.f32 %v162, %v227
  %v229 = vand.u32 %v94, 4294901760
  %230 = vmatmul.f32.gmra.mxu0 %v229
  %v231 = vpop.f32.mrf.mxu0
  %v232 = vadd.f32 %v170, %v231
  %v233 = vand.u32 %v97, 4294901760
  %234 = vmatmul.f32.gmra.mxu0 %v233
  %v235 = vpop.f32.mrf.mxu0
  %v236 = vadd.f32 %v178, %v235
  %v237 = vand.u32 %v100, 4294901760
  %238 = vmatmul.f32.gmra.mxu0 %v237
  %v239 = vpop.f32.mrf.mxu0
  %v240 = vadd.f32 %v186, %v239
  %241 = vdwg.mxu0
  %242 = vmatpush.msra.mxu0 0.0
  %243 = vmatpush.msra.mxu0 0.0
  %244 = vmatpush.msra.mxu0 0.0
  %245 = vmatpush.msra.mxu0 0.0
  %246 = vmatpush.msra.mxu0 0.0
  %247 = vmatpush.msra.mxu0 0.0
  %248 = vmatpush.msra.mxu0 0.0
  %249 = vmatpush.msra.mxu0 0.0
  %250 = vmatpush.msra.mxu0 0.0
  %251 = vmatpush.msra.mxu0 0.0
  %252 = vmatpush.msra.mxu0 0.0
  %253 = vmatpush.msra.mxu0 0.0
  %254 = vmatpush.msra.mxu0 0.0
  %255 = vmatpush.msra.mxu0 0.0
  %256 = vmatpush.msra.mxu0 0.0
  %v257 = vand.u32 %v104, 4294901760
  %v258 = vsub.f32 %v104, %v257
  %259 = vmatpush.msra.mxu0 %v258
  %v260 = vand.u32 %v79, 4294901760
  %v261 = vsub.f32 %v79, %v260
  %262 = vmatmul.f32.gmra.mxu0 %v261
  %v263 = vpop.f32.mrf.mxu0
  %v264 = vadd.f32 %v212, %v263
  %v265 = vand.u32 %v82, 4294901760
  %v266 = vsub.f32 %v82, %v265
  %267 = vmatmul.f32.gmra.mxu0 %v266
  %v268 = vpop.f32.mrf.mxu0
  %v269 = vadd.f32 %v216, %v268
  %v270 = vand.u32 %v85, 4294901760
  %v271 = vsub.f32 %v85, %v270
  %272 = vmatmul.f32.gmra.mxu0 %v271
  %v273 = vpop.f32.mrf.mxu0
  %v274 = vadd.f32 %v220, %v273
  %v275 = vand.u32 %v88, 4294901760
  %v276 = vsub.f32 %v88, %v275
  %277 = vmatmul.f32.gmra.mxu0 %v276
  %v278 = vpop.f32.mrf.mxu0
  %v279 = vadd.f32 %v224, %v278
  %v280 = vand.u32 %v91, 4294901760
  %v281 = vsub.f32 %v91, %v280
  %282 = vmatmul.f32.gmra.mxu0 %v281
  %v283 = vpop.f32.mrf.mxu0
  %v284 = vadd.f32 %v228, %v283
  %v285 = vand.u32 %v94, 4294901760
  %v286 = vsub.f32 %v94, %v285
  %287 = vmatmul.f32.gmra.mxu0 %v286
  %v288 = vpop.f32.mrf.mxu0
  %v289 = vadd.f32 %v232, %v288
  %v290 = vand.u32 %v97, 4294901760
  %v291 = vsub.f32 %v97, %v290
  %292 = vmatmul.f32.gmra.mxu0 %v291
  %v293 = vpop.f32.mrf.mxu0
  %v294 = vadd.f32 %v236, %v293
  %v295 = vand.u32 %v100, 4294901760
  %v296 = vsub.f32 %v100, %v295
  %297 = vmatmul.f32.gmra.mxu0 %v296
  %v298 = vpop.f32.mrf.mxu0
  %v299 = vadd.f32 %v240, %v298
  %300 = vdwg.mxu0
  %301 = vmatpush.msra.mxu0 0.0
  %302 = vmatpush.msra.mxu0 0.0
  %303 = vmatpush.msra.mxu0 0.0
  %304 = vmatpush.msra.mxu0 0.0
  %305 = vmatpush.msra.mxu0 0.0
  %306 = vmatpush.msra.mxu0 0.0
  %307 = vmatpush.msra.mxu0 0.0
  %308 = vmatpush.msra.mxu0 0.0
  %309 = vmatpush.msra.mxu0 0.0
  %310 = vmatpush.msra.mxu0 0.0
  %311 = vmatpush.msra.mxu0 0.0
  %312 = vmatpush.msra.mxu0 0.0
  %313 = vmatpush.msra.mxu0 0.0
  %314 = vmatpush.msra.mxu0 0.0
  %315 = vmatpush.msra.mxu0 0.0
  %v316 = vand.u32 %v104, 4294901760
  %317 = vmatpush.msra.mxu0 %v316
  %v318 = vand.u32 %v79, 4294901760
  %v319 = vsub.f32 %v79, %v318
  %v320 = vand.u32 %v319, 4294901760
  %321 = vmatmul.f32.gmra.mxu0 %v320
  %v322 = vpop.f32.mrf.mxu0
  %v323 = vadd.f32 %v264, %v322
  %v324 = vand.u32 %v82, 4294901760
  %v325 = vsub.f32 %v82, %v324
  %v326 = vand.u32 %v325, 4294901760
  %327 = vmatmul.f32.gmra.mxu0 %v326
  %v328 = vpop.f32.mrf.mxu0
  %v329 = vadd.f32 %v269, %v328
  %v330 = vand.u32 %v85, 4294901760
  %v331 = vsub.f32 %v85, %v330
  %v332 = vand.u32 %v331, 4294901760
  %333 = vmatmul.f32.gmra.mxu0 %v332
  %v334 = vpop.f32.mrf.mxu0
  %v335 = vadd.f32 %v274, %v334
  %v336 = vand.u32 %v88, 4294901760
  %v337 = vsub.f32 %v88, %v336
  %v338 = vand.u32 %v337, 4294901760
  %339 = vmatmul.f32.gmra.mxu0 %v338
  %v340 = vpop.f32.mrf.mxu0
  %v341 = vadd.f32 %v279, %v340
  %v342 = vand.u32 %v91, 4294901760
  %v343 = vsub.f32 %v91, %v342
  %v344 = vand.u32 %v343, 4294901760
  %345 = vmatmul.f32.gmra.mxu0 %v344
  %v346 = vpop.f32.mrf.mxu0
  %v347 = vadd.f32 %v284, %v346
  %v348 = vand.u32 %v94, 4294901760
  %v349 = vsub.f32 %v94, %v348
  %v350 = vand.u32 %v349, 4294901760
  %351 = vmatmul.f32.gmra.mxu0 %v350
  %v352 = vpop.f32.mrf.mxu0
  %v353 = vadd.f32 %v289, %v352
  %v354 = vand.u32 %v97, 4294901760
  %v355 = vsub.f32 %v97, %v354
  %v356 = vand.u32 %v355, 4294901760
  %357 = vmatmul.f32.gmra.mxu0 %v356
  %v358 = vpop.f32.mrf.mxu0
  %v359 = vadd.f32 %v294, %v358
  %v360 = vand.u32 %v100, 4294901760
  %v361 = vsub.f32 %v100, %v360
  %v362 = vand.u32 %v361, 4294901760
  %363 = vmatmul.f32.gmra.mxu0 %v362
  %v364 = vpop.f32.mrf.mxu0
  %v365 = vadd.f32 %v299, %v364
  %366 = vdwg.mxu0
  %367 = vmatpush.msra.mxu0 0.0
  %368 = vmatpush.msra.mxu0 0.0
  %369 = vmatpush.msra.mxu0 0.0
  %370 = vmatpush.msra.mxu0 0.0
  %371 = vmatpush.msra.mxu0 0.0
  %372 = vmatpush.msra.mxu0 0.0
  %373 = vmatpush.msra.mxu0 0.0
  %374 = vmatpush.msra.mxu0 0.0
  %375 = vmatpush.msra.mxu0 0.0
  %376 = vmatpush.msra.mxu0 0.0
  %377 = vmatpush.msra.mxu0 0.0
  %378 = vmatpush.msra.mxu0 0.0
  %379 = vmatpush.msra.mxu0 0.0
  %380 = vmatpush.msra.mxu0 0.0
  %381 = vmatpush.msra.mxu0 0.0
  %v382 = vand.u32 %v104, 4294901760
  %v383 = vsub.f32 %v104, %v382
  %v384 = vand.u32 %v383, 4294901760
  %385 = vmatpush.msra.mxu0 %v384
  %v386 = vand.u32 %v79, 4294901760
  %387 = vmatmul.f32.gmra.mxu0 %v386
  %v388 = vpop.f32.mrf.mxu0
  %v389 = vadd.f32 %v323, %v388
  %v390 = vand.u32 %v82, 4294901760
  %391 = vmatmul.f32.gmra.mxu0 %v390
  %v392 = vpop.f32.mrf.mxu0
  %v393 = vadd.f32 %v329, %v392
  %v394 = vand.u32 %v85, 4294901760
  %395 = vmatmul.f32.gmra.mxu0 %v394
  %v396 = vpop.f32.mrf.mxu0
  %v397 = vadd.f32 %v335, %v396
  %v398 = vand.u32 %v88, 4294901760
  %399 = vmatmul.f32.gmra.mxu0 %v398
  %v400 = vpop.f32.mrf.mxu0
  %v401 = vadd.f32 %v341, %v400
  %v402 = vand.u32 %v91, 4294901760
  %403 = vmatmul.f32.gmra.mxu0 %v402
  %v404 = vpop.f32.mrf.mxu0
  %v405 = vadd.f32 %v347, %v404
  %v406 = vand.u32 %v94, 4294901760
  %407 = vmatmul.f32.gmra.mxu0 %v406
  %v408 = vpop.f32.mrf.mxu0
  %v409 = vadd.f32 %v353, %v408
  %v410 = vand.u32 %v97, 4294901760
  %411 = vmatmul.f32.gmra.mxu0 %v410
  %v412 = vpop.f32.mrf.mxu0
  %v413 = vadd.f32 %v359, %v412
  %v414 = vand.u32 %v100, 4294901760
  %415 = vmatmul.f32.gmra.mxu0 %v414
  %v416 = vpop.f32.mrf.mxu0
  %v417 = vadd.f32 %v365, %v416
  %418 = vdwg.mxu0
  %419 = vmatpush.msra.mxu0 0.0
  %420 = vmatpush.msra.mxu0 0.0
  %421 = vmatpush.msra.mxu0 0.0
  %422 = vmatpush.msra.mxu0 0.0
  %423 = vmatpush.msra.mxu0 0.0
  %424 = vmatpush.msra.mxu0 0.0
  %425 = vmatpush.msra.mxu0 0.0
  %426 = vmatpush.msra.mxu0 0.0
  %427 = vmatpush.msra.mxu0 0.0
  %428 = vmatpush.msra.mxu0 0.0
  %429 = vmatpush.msra.mxu0 0.0
  %430 = vmatpush.msra.mxu0 0.0
  %431 = vmatpush.msra.mxu0 0.0
  %432 = vmatpush.msra.mxu0 0.0
  %433 = vmatpush.msra.mxu0 0.0
  %v434 = vand.u32 %v104, 4294901760
  %435 = vmatpush.msra.mxu0 %v434
  %v436 = vand.u32 %v79, 4294901760
  %437 = vmatmul.f32.gmra.mxu0 %v436
  %v438 = vpop.f32.mrf.mxu0
  %v439 = vadd.f32 %v389, %v438
  %v440 = vand.u32 %v82, 4294901760
  %441 = vmatmul.f32.gmra.mxu0 %v440
  %v442 = vpop.f32.mrf.mxu0
  %v443 = vadd.f32 %v393, %v442
  %v444 = vand.u32 %v85, 4294901760
  %445 = vmatmul.f32.gmra.mxu0 %v444
  %v446 = vpop.f32.mrf.mxu0
  %v447 = vadd.f32 %v397, %v446
  %v448 = vand.u32 %v88, 4294901760
  %449 = vmatmul.f32.gmra.mxu0 %v448
  %v450 = vpop.f32.mrf.mxu0
  %v451 = vadd.f32 %v401, %v450
  %v452 = vand.u32 %v91, 4294901760
  %453 = vmatmul.f32.gmra.mxu0 %v452
  %v454 = vpop.f32.mrf.mxu0
  %v455 = vadd.f32 %v405, %v454
  %v456 = vand.u32 %v94, 4294901760
  %457 = vmatmul.f32.gmra.mxu0 %v456
  %v458 = vpop.f32.mrf.mxu0
  %v459 = vadd.f32 %v409, %v458
  %v460 = vand.u32 %v97, 4294901760
  %461 = vmatmul.f32.gmra.mxu0 %v460
  %v462 = vpop.f32.mrf.mxu0
  %v463 = vadd.f32 %v413, %v462
  %v464 = vand.u32 %v100, 4294901760
  %465 = vmatmul.f32.gmra.mxu0 %v464
  %v466 = vpop.f32.mrf.mxu0
  %v467 = vadd.f32 %v417, %v466
  %468 = vdwg.mxu0
  %v469 = vtanh.pop %v439
  %v470 = vtanh.pop %v443
  %v471 = vtanh.pop %v447
  %v472 = vtanh.pop %v451
  %v473 = vtanh.pop %v455
  %v474 = vtanh.pop %v459
  %v475 = vtanh.pop %v463
  %v476 = vtanh.pop %v467
  %v477 = vld [vmem:[%s3] sm:$0xff]
  %v478 = vld [vmem:[%s3 + $0x8] sm:$0xff]
  %v479 = vld [vmem:[%s3 + $0x10] sm:$0x3f]
  %v480 = vld [vmem:[%s4] sm:$0xff]
  %v481 = vld [vmem:[%s4 + $0x8] sm:$0xff]
  %v482 = vld [vmem:[%s4 + $0x10] sm:$0x3f]
  %484 = vset.pattern.permute.xlu0 0
  %485 = vperm.xlu0 %484, %v480
  %v486 = vpop.permute.xlu0 %485
  %489 = vset.pattern.permute.xlu0 0
  %490 = vperm.xlu0 %489, %v481
  %v491 = vpop.permute.xlu0 %490
  %494 = vset.pattern.permute.xlu0 0
  %495 = vperm.xlu0 %494, %v482
  %v496 = vpop.permute.xlu0 %495
  %vm498 = vcmask 523264
  %v500 = vsel %vm498, %v477, 0
  %v503 = vsel %vm498, %v478, 0
  %v506 = vsel %vm498, %v479, 0
  %508 = vmatpush.msra.mxu0 0.0
  %509 = vmatpush.msra.mxu0 0.0
  %510 = vmatpush.msra.mxu0 0.0
  %511 = vmatpush.msra.mxu0 0.0
  %512 = vmatpush.msra.mxu0 0.0
  %513 = vmatpush.msra.mxu0 0.0
  %514 = vmatpush.msra.mxu0 0.0
  %515 = vmatpush.msra.mxu0 0.0
  %v516 = vand.u32 %v476, 4294901760
  %517 = vmatpush.msra.mxu0 %v516
  %v518 = vand.u32 %v475, 4294901760
  %519 = vmatpush.msra.mxu0 %v518
  %v520 = vand.u32 %v474, 4294901760
  %521 = vmatpush.msra.mxu0 %v520
  %v522 = vand.u32 %v473, 4294901760
  %523 = vmatpush.msra.mxu0 %v522
  %v524 = vand.u32 %v472, 4294901760
  %525 = vmatpush.msra.mxu0 %v524
  %v526 = vand.u32 %v471, 4294901760
  %527 = vmatpush.msra.mxu0 %v526
  %v528 = vand.u32 %v470, 4294901760
  %529 = vmatpush.msra.mxu0 %v528
  %v530 = vand.u32 %v469, 4294901760
  %531 = vmatpush.msra.mxu0 %v530
  %v532 = vand.u32 %v500, 4294901760
  %v533 = vsub.f32 %v500, %v532
  %v534 = vand.u32 %v533, 4294901760
  %v535 = vsub.f32 %v533, %v534
  %v536 = vand.u32 %v535, 4294901760
  %537 = vmatmul.f32.gmra.mxu0 %v536
  %v538 = vpop.f32.mrf.mxu0
  %v539 = vadd.f32 %v486, %v538
  %v540 = vand.u32 %v503, 4294901760
  %v541 = vsub.f32 %v503, %v540
  %v542 = vand.u32 %v541, 4294901760
  %v543 = vsub.f32 %v541, %v542
  %v544 = vand.u32 %v543, 4294901760
  %545 = vmatmul.f32.gmra.mxu0 %v544
  %v546 = vpop.f32.mrf.mxu0
  %v547 = vadd.f32 %v491, %v546
  %v548 = vand.u32 %v506, 4294901760
  %v549 = vsub.f32 %v506, %v548
  %v550 = vand.u32 %v549, 4294901760
  %v551 = vsub.f32 %v549, %v550
  %v552 = vand.u32 %v551, 4294901760
  %553 = vmatmul.f32.gmra.mxu0 %v552
  %v554 = vpop.f32.mrf.mxu0
  %v555 = vadd.f32 %v496, %v554
  %556 = vdwg.mxu0
  %557 = vmatpush.msra.mxu0 0.0
  %558 = vmatpush.msra.mxu0 0.0
  %559 = vmatpush.msra.mxu0 0.0
  %560 = vmatpush.msra.mxu0 0.0
  %561 = vmatpush.msra.mxu0 0.0
  %562 = vmatpush.msra.mxu0 0.0
  %563 = vmatpush.msra.mxu0 0.0
  %564 = vmatpush.msra.mxu0 0.0
  %v565 = vand.u32 %v476, 4294901760
  %v566 = vsub.f32 %v476, %v565
  %v567 = vand.u32 %v566, 4294901760
  %v568 = vsub.f32 %v566, %v567
  %v569 = vand.u32 %v568, 4294901760
  %570 = vmatpush.msra.mxu0 %v569
  %v571 = vand.u32 %v475, 4294901760
  %v572 = vsub.f32 %v475, %v571
  %v573 = vand.u32 %v572, 4294901760
  %v574 = vsub.f32 %v572, %v573
  %v575 = vand.u32 %v574, 4294901760
  %576 = vmatpush.msra.mxu0 %v575
  %v577 = vand.u32 %v474, 4294901760
  %v578 = vsub.f32 %v474, %v577
  %v579 = vand.u32 %v578, 4294901760
  %v580 = vsub.f32 %v578, %v579
  %v581 = vand.u32 %v580, 4294901760
  %582 = vmatpush.msra.mxu0 %v581
  %v583 = vand.u32 %v473, 4294901760
  %v584 = vsub.f32 %v473, %v583
  %v585 = vand.u32 %v584, 4294901760
  %v586 = vsub.f32 %v584, %v585
  %v587 = vand.u32 %v586, 4294901760
  %588 = vmatpush.msra.mxu0 %v587
  %v589 = vand.u32 %v472, 4294901760
  %v590 = vsub.f32 %v472, %v589
  %v591 = vand.u32 %v590, 4294901760
  %v592 = vsub.f32 %v590, %v591
  %v593 = vand.u32 %v592, 4294901760
  %594 = vmatpush.msra.mxu0 %v593
  %v595 = vand.u32 %v471, 4294901760
  %v596 = vsub.f32 %v471, %v595
  %v597 = vand.u32 %v596, 4294901760
  %v598 = vsub.f32 %v596, %v597
  %v599 = vand.u32 %v598, 4294901760
  %600 = vmatpush.msra.mxu0 %v599
  %v601 = vand.u32 %v470, 4294901760
  %v602 = vsub.f32 %v470, %v601
  %v603 = vand.u32 %v602, 4294901760
  %v604 = vsub.f32 %v602, %v603
  %v605 = vand.u32 %v604, 4294901760
  %606 = vmatpush.msra.mxu0 %v605
  %v607 = vand.u32 %v469, 4294901760
  %v608 = vsub.f32 %v469, %v607
  %v609 = vand.u32 %v608, 4294901760
  %v610 = vsub.f32 %v608, %v609
  %v611 = vand.u32 %v610, 4294901760
  %612 = vmatpush.msra.mxu0 %v611
  %v613 = vand.u32 %v500, 4294901760
  %614 = vmatmul.f32.gmra.mxu0 %v613
  %v615 = vpop.f32.mrf.mxu0
  %v616 = vadd.f32 %v539, %v615
  %v617 = vand.u32 %v503, 4294901760
  %618 = vmatmul.f32.gmra.mxu0 %v617
  %v619 = vpop.f32.mrf.mxu0
  %v620 = vadd.f32 %v547, %v619
  %v621 = vand.u32 %v506, 4294901760
  %622 = vmatmul.f32.gmra.mxu0 %v621
  %v623 = vpop.f32.mrf.mxu0
  %v624 = vadd.f32 %v555, %v623
  %625 = vdwg.mxu0
  %626 = vmatpush.msra.mxu0 0.0
  %627 = vmatpush.msra.mxu0 0.0
  %628 = vmatpush.msra.mxu0 0.0
  %629 = vmatpush.msra.mxu0 0.0
  %630 = vmatpush.msra.mxu0 0.0
  %631 = vmatpush.msra.mxu0 0.0
  %632 = vmatpush.msra.mxu0 0.0
  %633 = vmatpush.msra.mxu0 0.0
  %v634 = vand.u32 %v476, 4294901760
  %v635 = vsub.f32 %v476, %v634
  %636 = vmatpush.msra.mxu0 %v635
  %v637 = vand.u32 %v475, 4294901760
  %v638 = vsub.f32 %v475, %v637
  %639 = vmatpush.msra.mxu0 %v638
  %v640 = vand.u32 %v474, 4294901760
  %v641 = vsub.f32 %v474, %v640
  %642 = vmatpush.msra.mxu0 %v641
  %v643 = vand.u32 %v473, 4294901760
  %v644 = vsub.f32 %v473, %v643
  %645 = vmatpush.msra.mxu0 %v644
  %v646 = vand.u32 %v472, 4294901760
  %v647 = vsub.f32 %v472, %v646
  %648 = vmatpush.msra.mxu0 %v647
  %v649 = vand.u32 %v471, 4294901760
  %v650 = vsub.f32 %v471, %v649
  %651 = vmatpush.msra.mxu0 %v650
  %v652 = vand.u32 %v470, 4294901760
  %v653 = vsub.f32 %v470, %v652
  %654 = vmatpush.msra.mxu0 %v653
  %v655 = vand.u32 %v469, 4294901760
  %v656 = vsub.f32 %v469, %v655
  %657 = vmatpush.msra.mxu0 %v656
  %v658 = vand.u32 %v500, 4294901760
  %v659 = vsub.f32 %v500, %v658
  %660 = vmatmul.f32.gmra.mxu0 %v659
  %v661 = vpop.f32.mrf.mxu0
  %v662 = vadd.f32 %v616, %v661
  %v663 = vand.u32 %v503, 4294901760
  %v664 = vsub.f32 %v503, %v663
  %665 = vmatmul.f32.gmra.mxu0 %v664
  %v666 = vpop.f32.mrf.mxu0
  %v667 = vadd.f32 %v620, %v666
  %v668 = vand.u32 %v506, 4294901760
  %v669 = vsub.f32 %v506, %v668
  %670 = vmatmul.f32.gmra.mxu0 %v669
  %v671 = vpop.f32.mrf.mxu0
  %v672 = vadd.f32 %v624, %v671
  %673 = vdwg.mxu0
  %674 = vmatpush.msra.mxu0 0.0
  %675 = vmatpush.msra.mxu0 0.0
  %676 = vmatpush.msra.mxu0 0.0
  %677 = vmatpush.msra.mxu0 0.0
  %678 = vmatpush.msra.mxu0 0.0
  %679 = vmatpush.msra.mxu0 0.0
  %680 = vmatpush.msra.mxu0 0.0
  %681 = vmatpush.msra.mxu0 0.0
  %v682 = vand.u32 %v476, 4294901760
  %683 = vmatpush.msra.mxu0 %v682
  %v684 = vand.u32 %v475, 4294901760
  %685 = vmatpush.msra.mxu0 %v684
  %v686 = vand.u32 %v474, 4294901760
  %687 = vmatpush.msra.mxu0 %v686
  %v688 = vand.u32 %v473, 4294901760
  %689 = vmatpush.msra.mxu0 %v688
  %v690 = vand.u32 %v472, 4294901760
  %691 = vmatpush.msra.mxu0 %v690
  %v692 = vand.u32 %v471, 4294901760
  %693 = vmatpush.msra.mxu0 %v692
  %v694 = vand.u32 %v470, 4294901760
  %695 = vmatpush.msra.mxu0 %v694
  %v696 = vand.u32 %v469, 4294901760
  %697 = vmatpush.msra.mxu0 %v696
  %v698 = vand.u32 %v500, 4294901760
  %v699 = vsub.f32 %v500, %v698
  %v700 = vand.u32 %v699, 4294901760
  %701 = vmatmul.f32.gmra.mxu0 %v700
  %v702 = vpop.f32.mrf.mxu0
  %v703 = vadd.f32 %v662, %v702
  %v704 = vand.u32 %v503, 4294901760
  %v705 = vsub.f32 %v503, %v704
  %v706 = vand.u32 %v705, 4294901760
  %707 = vmatmul.f32.gmra.mxu0 %v706
  %v708 = vpop.f32.mrf.mxu0
  %v709 = vadd.f32 %v667, %v708
  %v710 = vand.u32 %v506, 4294901760
  %v711 = vsub.f32 %v506, %v710
  %v712 = vand.u32 %v711, 4294901760
  %713 = vmatmul.f32.gmra.mxu0 %v712
  %v714 = vpop.f32.mrf.mxu0
  %v715 = vadd.f32 %v672, %v714
  %716 = vdwg.mxu0
  %717 = vmatpush.msra.mxu0 0.0
  %718 = vmatpush.msra.mxu0 0.0
  %719 = vmatpush.msra.mxu0 0.0
  %720 = vmatpush.msra.mxu0 0.0
  %721 = vmatpush.msra.mxu0 0.0
  %722 = vmatpush.msra.mxu0 0.0
  %723 = vmatpush.msra.mxu0 0.0
  %724 = vmatpush.msra.mxu0 0.0
  %v725 = vand.u32 %v476, 4294901760
  %v726 = vsub.f32 %v476, %v725
  %v727 = vand.u32 %v726, 4294901760
  %728 = vmatpush.msra.mxu0 %v727
  %v729 = vand.u32 %v475, 4294901760
  %v730 = vsub.f32 %v475, %v729
  %v731 = vand.u32 %v730, 4294901760
  %732 = vmatpush.msra.mxu0 %v731
  %v733 = vand.u32 %v474, 4294901760
  %v734 = vsub.f32 %v474, %v733
  %v735 = vand.u32 %v734, 4294901760
  %736 = vmatpush.msra.mxu0 %v735
  %v737 = vand.u32 %v473, 4294901760
  %v738 = vsub.f32 %v473, %v737
  %v739 = vand.u32 %v738, 4294901760
  %740 = vmatpush.msra.mxu0 %v739
  %v741 = vand.u32 %v472, 4294901760
  %v742 = vsub.f32 %v472, %v741
  %v743 = vand.u32 %v742, 4294901760
  %744 = vmatpush.msra.mxu0 %v743
  %v745 = vand.u32 %v471, 4294901760
  %v746 = vsub.f32 %v471, %v745
  %v747 = vand.u32 %v746, 4294901760
  %748 = vmatpush.msra.mxu0 %v747
  %v749 = vand.u32 %v470, 4294901760
  %v750 = vsub.f32 %v470, %v749
  %v751 = vand.u32 %v750, 4294901760
  %752 = vmatpush.msra.mxu0 %v751
  %v753 = vand.u32 %v469, 4294901760
  %v754 = vsub.f32 %v469, %v753
  %v755 = vand.u32 %v754, 4294901760
  %756 = vmatpush.msra.mxu0 %v755
  %v757 = vand.u32 %v500, 4294901760
  %758 = vmatmul.f32.gmra.mxu0 %v757
  %v759 = vpop.f32.mrf.mxu0
  %v760 = vadd.f32 %v703, %v759
  %v761 = vand.u32 %v503, 4294901760
  %762 = vmatmul.f32.gmra.mxu0 %v761
  %v763 = vpop.f32.mrf.mxu0
  %v764 = vadd.f32 %v709, %v763
  %v765 = vand.u32 %v506, 4294901760
  %766 = vmatmul.f32.gmra.mxu0 %v765
  %v767 = vpop.f32.mrf.mxu0
  %v768 = vadd.f32 %v715, %v767
  %769 = vdwg.mxu0
  %770 = vmatpush.msra.mxu0 0.0
  %771 = vmatpush.msra.mxu0 0.0
  %772 = vmatpush.msra.mxu0 0.0
  %773 = vmatpush.msra.mxu0 0.0
  %774 = vmatpush.msra.mxu0 0.0
  %775 = vmatpush.msra.mxu0 0.0
  %776 = vmatpush.msra.mxu0 0.0
  %777 = vmatpush.msra.mxu0 0.0
  %v778 = vand.u32 %v476, 4294901760
  %779 = vmatpush.msra.mxu0 %v778
  %v780 = vand.u32 %v475, 4294901760
  %781 = vmatpush.msra.mxu0 %v780
  %v782 = vand.u32 %v474, 4294901760
  %783 = vmatpush.msra.mxu0 %v782
  %v784 = vand.u32 %v473, 4294901760
  %785 = vmatpush.msra.mxu0 %v784
  %v786 = vand.u32 %v472, 4294901760
  %787 = vmatpush.msra.mxu0 %v786
  %v788 = vand.u32 %v471, 4294901760
  %789 = vmatpush.msra.mxu0 %v788
  %v790 = vand.u32 %v470, 4294901760
  %791 = vmatpush.msra.mxu0 %v790
  %v792 = vand.u32 %v469, 4294901760
  %793 = vmatpush.msra.mxu0 %v792
  %v794 = vand.u32 %v500, 4294901760
  %795 = vmatmul.f32.gmra.mxu0 %v794
  %v796 = vpop.f32.mrf.mxu0
  %v797 = vadd.f32 %v760, %v796
  %v798 = vand.u32 %v503, 4294901760
  %799 = vmatmul.f32.gmra.mxu0 %v798
  %v800 = vpop.f32.mrf.mxu0
  %v801 = vadd.f32 %v764, %v800
  %v802 = vand.u32 %v506, 4294901760
  %803 = vmatmul.f32.gmra.mxu0 %v802
  %v804 = vpop.f32.mrf.mxu0
  %v805 = vadd.f32 %v768, %v804
  %806 = vdwg.mxu0
  %v807 = vrot.slane %v20, 7
  %vm812 = vcmask 1044480
  %v813 = vrot.slane %v797, 3
  %v814 = vrot.slane %v801, 3
  %v815 = vsel %vm812, %v813, %v814
  %v816 = vrot.slane %v805, 3
  %v817 = vsel %vm812, %v814, %v816
  %vm822 = vcmask 1040384
  %v823 = vsel %vm822, 1.0, %v807
  %v824 = vsel %vm812, %v823, %v813
  %vm825 = vcmask 64512
  %826 = vst.msk [vmem:[%s5] sm:$0xff] %vm825, %v824
  %827 = vst.msk [vmem:[%s5 + $0x8] sm:$0xff] %vm825, %v815
  %828 = vst.msk [vmem:[%s5 + $0x10] sm:$0xff] %vm825, %v817
  %vm829 = vcmask 59392
  %830 = vst.msk [vmem:[%s5 + $0x18] sm:$0x7] %vm829, %v816
  // Predicated region
  $region22: #{tpu_custom_call.1} parent=0 // pred_check
    _
  $region23: #{tpu_custom_call.1} parent=0 // pred_check_branch
    %832 = sbr.rel (0) target = $region25
  $region24: #{tpu_custom_call.1} parent=0 // pred_region
    _
  $region25: #{tpu_custom_call.1} parent=0 // pred_fallthru
    _
  // Predicated region
  $region26: #{tpu_custom_call.1} parent=0 // pred_check
    _
  $region27: #{tpu_custom_call.1} parent=0 // pred_check_branch
    %834 = sbr.rel (0) target = $region29
  $region28: #{tpu_custom_call.1} parent=0 // pred_region
    _
  $region29: #{tpu_custom_call.1} parent=0 // pred_fallthru
    _

</llo_original>
